<compile_context>
chip_gen: v5e
topology: v5e:2x2
jax: 0.10.0
libtpu: 0.0.40
codegen_flags: <defaults>
</compile_context>

<pallas_src>
import math
import functools

import jax
import jax.numpy as jnp
from jax import lax
from jax.experimental import pallas as pl
from jax.experimental.pallas import tpu as pltpu


def _saj_fused_kernel(x_ref, wqkv_ref, wo_ref, o_ref,
                      q_buf, k_buf, v_buf, *, d, tq):
    """One grid step = (batch tile b, layer l): causal attention + residual.

    The activation for this batch tile lives in o_ref (VMEM-resident across
    the layer axis); HBM is touched once on entry (l == 0) and once on exit.
    """
    l = pl.program_id(1)

    # First layer for this batch tile: seed the resident activation from HBM.
    @pl.when(l == 0)
    def _():
        o_ref[...] = x_ref[...]

    tb, s_len, _ = o_ref.shape
    cdtype = o_ref.dtype

    x2d = o_ref[...].reshape(tb * s_len, d)        # (Tb*S, D), compute dtype

    wq = wqkv_ref[0, 0]                            # (D, D); 1/sqrt(D) folded in
    wk = wqkv_ref[0, 1]
    wv = wqkv_ref[0, 2]
    wo = wo_ref[0]                                 # (D, D)

    # Projections on the flattened batch*seq axis (fat MXU M dim), f32 acc,
    # cast to the compute dtype and parked in VMEM scratch so the flash loop
    # slices refs (cheap, bounded live ranges) instead of big live values.
    q_buf[...] = jnp.dot(x2d, wq, preferred_element_type=jnp.float32
                         ).astype(cdtype).reshape(tb, s_len, d)
    k_buf[...] = jnp.dot(x2d, wk, preferred_element_type=jnp.float32
                         ).astype(cdtype).reshape(tb, s_len, d)
    v_buf[...] = jnp.dot(x2d, wv, preferred_element_type=jnp.float32
                         ).astype(cdtype).reshape(tb, s_len, d)

    nq = s_len // tq
    row_ids = lax.broadcasted_iota(jnp.int32, (tq, tq), 0)
    col_ids = lax.broadcasted_iota(jnp.int32, (tq, tq), 1)
    diag_mask = (col_ids <= row_ids)[None, :, :]   # (1, tq, tq)
    neg_big = jnp.float32(-1e30)

    for qb in range(nq):
        q_blk = q_buf[:, qb * tq:(qb + 1) * tq, :]               # (Tb, tq, D)
        m_i = jnp.full((tb, tq, 1), -1e30, jnp.float32)
        l_i = jnp.zeros((tb, tq, 1), jnp.float32)
        acc = jnp.zeros((tb, tq, d), jnp.float32)

        def kv_step(kb, carry):
            m_prev, l_prev, acc_prev = carry
            start = pl.multiple_of(kb * tq, tq)
            k_blk = k_buf[:, pl.ds(start, tq), :]
            v_blk = v_buf[:, pl.ds(start, tq), :]
            s = jnp.einsum('bqd,bkd->bqk', q_blk, k_blk,
                           preferred_element_type=jnp.float32)
            m_new = jnp.maximum(m_prev, jnp.max(s, axis=-1, keepdims=True))
            alpha = jnp.exp(m_prev - m_new)
            p = jnp.exp(s - m_new)
            l_new = alpha * l_prev + jnp.sum(p, axis=-1, keepdims=True)
            acc_new = alpha * acc_prev + jnp.einsum(
                'bqk,bkd->bqd', p.astype(cdtype), v_blk,
                preferred_element_type=jnp.float32)
            return m_new, l_new, acc_new

        # KV blocks strictly below the diagonal: no masking needed.
        if qb > 0:
            m_i, l_i, acc = lax.fori_loop(0, qb, kv_step, (m_i, l_i, acc),
                                          unroll=2 if qb >= 2 else 1)

        # Diagonal block: element-wise tril mask (only place masking is paid).
        k_blk = k_buf[:, qb * tq:(qb + 1) * tq, :]
        v_blk = v_buf[:, qb * tq:(qb + 1) * tq, :]
        s = jnp.einsum('bqd,bkd->bqk', q_blk, k_blk,
                       preferred_element_type=jnp.float32)
        s = jnp.where(diag_mask, s, neg_big)
        m_new = jnp.maximum(m_i, jnp.max(s, axis=-1, keepdims=True))
        alpha = jnp.exp(m_i - m_new)
        p = jnp.exp(s - m_new)
        l_i = alpha * l_i + jnp.sum(p, axis=-1, keepdims=True)
        acc = alpha * acc + jnp.einsum('bqk,bkd->bqd', p.astype(cdtype), v_blk,
                                       preferred_element_type=jnp.float32)

        # Per-block finalize: normalize, Wo projection, residual, store into
        # the resident activation.  No full (S, D) concat / relayout.
        attn_blk = (acc * (1.0 / l_i)).astype(cdtype)            # (Tb, tq, D)
        x_blk = o_ref[:, qb * tq:(qb + 1) * tq, :]               # residual in
        proj = jnp.dot(attn_blk.reshape(tb * tq, d), wo,
                       preferred_element_type=jnp.float32).reshape(tb, tq, d)
        o_ref[:, qb * tq:(qb + 1) * tq, :] = (
            proj + x_blk.astype(jnp.float32)).astype(cdtype)


def _vmem_capacity_bytes():
    try:
        info = pltpu.get_tpu_info()
        cap = getattr(info, "vmem_capacity_bytes", None)
        if cap:
            return int(cap)
    except Exception:
        pass
    return 64 * 1024 * 1024            # conservative floor (v7x per-core VMEM)


def _default_q_block():
    # v6e/v7x MXU passes are 256-wide; v5e's are 128-wide.
    try:
        if "v5" in jax.devices()[0].device_kind.lower():
            return 128
    except Exception:
        pass
    return 256


def _pick_q_tile(S, q_block):
    if S <= q_block:
        return S
    for t in range(q_block, 0, -1):
        if S % t == 0:
            return t
    return S


def _pick_batch_tile(B, S, D, act_itemsize, vmem_cap):
    """Largest divisor of B whose activation working set fits a VMEM budget,
    while keeping >= 2 parallel grid steps when B allows (megacore / 2 TCs)."""
    budget = max(vmem_cap // 4, 4 * 1024 * 1024)
    tb = 1
    for cand in range(1, B + 1):
        if B % cand:
            continue
        # x in (2x) + resident out (2x) + q/k/v scratch + f32 temps (rough)
        work = cand * S * D * (7 * act_itemsize + 20)
        if work <= budget:
            tb = cand
    while tb > 1 and B // tb < 2:
        tb -= 1
        while tb > 1 and B % tb:
            tb -= 1
    return max(tb, 1)


def saj_loop(x, layer_params, *, q_block=None, batch_tile=None):
    """SAJLoop.forward: every layer fused into a single pallas_call."""
    B, S, D = x.shape
    L = len(layer_params)
    assert L >= 1

    vmem_cap = _vmem_capacity_bytes()
    scale = 1.0 / math.sqrt(D)

    # Stack weights as (L, 3, D, D): Q/K/V split falls on leading dims (never
    # a non-128 lane-offset slice of the activation), 1/sqrt(D) folded into Wq.
    wqkv = jnp.stack(
        [jnp.stack([wq * scale, wk, wv], axis=0)
         for (wq, wk, wv, _) in layer_params], axis=0).astype(x.dtype)
    wo_stack = jnp.stack([wo for (_, _, _, wo) in layer_params],
                         axis=0).astype(x.dtype)

    if q_block is None:
        q_block = _default_q_block()
    tq = _pick_q_tile(S, q_block)
    assert S % tq == 0

    a_item = jnp.dtype(x.dtype).itemsize
    w_item = jnp.dtype(wqkv.dtype).itemsize
    if batch_tile is None:
        batch_tile = _pick_batch_tile(B, S, D, a_item, vmem_cap)
    tb = batch_tile
    assert B % tb == 0

    kernel = functools.partial(_saj_fused_kernel, d=D, tq=tq)

    grid_spec = pltpu.PrefetchScalarGridSpec(
        num_scalar_prefetch=0,
        grid=(B // tb, L),                                 # layer innermost
        in_specs=[
            # x: one batch tile, same block across the layer axis.
            pl.BlockSpec((tb, S, D), lambda b, l: (b, 0, 0)),
            # Per-layer Q/K/V weights and output projection.
            pl.BlockSpec((1, 3, D, D), lambda b, l: (l, 0, 0, 0)),
            pl.BlockSpec((1, D, D), lambda b, l: (l, 0, 0)),
        ],
        # Output block index is constant across the layer axis -> activation
        # stays VMEM-resident; HBM writeback only when the batch tile changes.
        out_specs=pl.BlockSpec((tb, S, D), lambda b, l: (b, 0, 0)),
        scratch_shapes=[pltpu.VMEM((tb, S, D), x.dtype)] * 3,    # q/k/v
    )

    # VMEM footprint estimate (double-buffered blocks + scratch + f32 temps).
    vmem_est = (
        2 * tb * S * D * a_item           # x input blocks (double-buffered)
        + 2 * tb * S * D * a_item         # resident output blocks
        + 2 * 4 * D * D * w_item          # per-layer weights, double-buffered
        + 3 * tb * S * D * a_item         # q/k/v scratch
        + 3 * tb * S * D * 4              # f32 projection results
        + 2 * tb * tq * tq * 4            # score / prob tiles
        + 3 * tb * tq * D * 4             # acc + finalize temps
    )
    vmem_limit = None
    if vmem_est > 12 * 1024 * 1024:       # below v5e's 16 MiB default limit
        vmem_limit = min(int(vmem_est * 3 // 2), int(vmem_cap * 0.85))

    # Advisory cost estimate (causal ~halves the S^2 terms).
    flops = int(L * B * (8 * S * D * D + 2 * S * S * D))
    transcendentals = int(L * B * (S * S // 2 + 2 * S))
    bytes_accessed = int(2 * B * S * D * a_item
                         + (B // tb) * (wqkv.size + wo_stack.size) * w_item)

    return pl.pallas_call(
        kernel,
        out_shape=jax.ShapeDtypeStruct((B, S, D), x.dtype),
        grid_spec=grid_spec,
        compiler_params=pltpu.CompilerParams(
            dimension_semantics=("parallel", "arbitrary"),
            vmem_limit_bytes=vmem_limit),
        cost_estimate=pl.CostEstimate(flops=flops,
                                      transcendentals=transcendentals,
                                      bytes_accessed=bytes_accessed),
    )(x, wqkv, wo_stack)


def saj_loop_reference(x, layer_params):
    """Pure-JAX reference matching the assumed PyTorch layer semantics."""
    B, S, D = x.shape
    mask = jnp.tril(jnp.ones((S, S), jnp.float32))
    for (wq, wk, wv, wo) in layer_params:
        q = x @ wq
        k = x @ wk
        v = x @ wv
        scores = (q @ jnp.swapaxes(k, -1, -2)) / math.sqrt(D)
        scores = jnp.where(mask == 0, -1e30, scores)
        p = jax.nn.softmax(scores, axis=-1)
        x = (p @ v) @ wo + x
    return x


if __name__ == "__main__":
    B, S, D = 2, 8, 32
    n_layers = 2

    key = jax.random.PRNGKey(0)
    kx, *kws = jax.random.split(key, 1 + 4 * n_layers)
    x = jax.random.normal(kx, (B, S, D), dtype=jnp.float32)

    layer_params = []
    for li in range(n_layers):
        ws = []
        for wi in range(4):
            k = kws[li * 4 + wi]
            ws.append(jax.random.normal(k, (D, D), dtype=jnp.float32)
                      * (1.0 / math.sqrt(D)))
        layer_params.append(tuple(ws))

    out = jax.block_until_ready(saj_loop(x, layer_params))
    ref = saj_loop_reference(x, layer_params)

    assert out.shape == (B, S, D)
    assert jnp.allclose(out, ref, atol=5e-3, rtol=5e-3), "mismatch vs reference"

    print("KERNEL_OK")
</pallas_src>

<mosaic_0001>
module attributes {stable_mosaic.version = 11 : i64} {
  func.func @_saj_fused_kernel(%arg0: i32, %arg1: i32, %arg2: memref<1x8x32xf32, #tpu.memory_space<vmem>>, %arg3: memref<1x3x32x32xf32, #tpu.memory_space<vmem>>, %arg4: memref<1x32x32xf32, #tpu.memory_space<vmem>>, %arg5: memref<1x8x32xf32, #tpu.memory_space<vmem>>, %arg6: memref<1x8x32xf32, #tpu.memory_space<vmem>>, %arg7: memref<1x8x32xf32, #tpu.memory_space<vmem>>, %arg8: memref<1x8x32xf32, #tpu.memory_space<vmem>>) attributes {dimension_semantics = [#tpu.dimension_semantics<parallel>, #tpu.dimension_semantics<arbitrary>], iteration_bounds = array<i64: 2, 2>, scalar_prefetch = 0 : i64, scratch_operands = 3 : i64, tpu.core_type = #tpu.core_type<tc>, window_params = [{transform_indices = @transform_0, window_bounds = array<i64: 1, 8, 32>}, {transform_indices = @transform_1, window_bounds = array<i64: 1, 3, 32, 32>}, {transform_indices = @transform_2, window_bounds = array<i64: 1, 32, 32>}, {transform_indices = @transform_3, window_bounds = array<i64: 1, 8, 32>}]} {
    %c0_i32 = arith.constant 0 : i32
    %0 = arith.cmpi eq, %arg1, %c0_i32 : i32
    %1 = arith.extui %0 : i1 to i32
    %c0_i32_0 = arith.constant 0 : i32
    %2 = arith.cmpi ne, %1, %c0_i32_0 : i32
    scf.if %2 {
      %c0_52 = arith.constant 0 : index
      %c0_53 = arith.constant 0 : index
      %c0_54 = arith.constant 0 : index
      %61 = vector.load %arg2[%c0_52, %c0_53, %c0_54] : memref<1x8x32xf32, #tpu.memory_space<vmem>>, vector<1x8x32xf32>
      %c0_55 = arith.constant 0 : index
      %c0_56 = arith.constant 0 : index
      %c0_57 = arith.constant 0 : index
      %62 = vector.load %arg5[%c0_55, %c0_56, %c0_57] : memref<1x8x32xf32, #tpu.memory_space<vmem>>, vector<1x8x32xf32>
      tpu.vector_store %arg5[%c0_55, %c0_56, %c0_57], %61 {strides = array<i32>} : memref<1x8x32xf32, #tpu.memory_space<vmem>>, vector<1x8x32xf32>,
    } else {
    }
    %c0 = arith.constant 0 : index
    %c0_1 = arith.constant 0 : index
    %c0_2 = arith.constant 0 : index
    %3 = vector.load %arg5[%c0, %c0_1, %c0_2] : memref<1x8x32xf32, #tpu.memory_space<vmem>>, vector<1x8x32xf32>
    %4 = vector.shape_cast %3 : vector<1x8x32xf32> to vector<8x32xf32>
    %c0_3 = arith.constant 0 : index
    %c0_4 = arith.constant 0 : index
    %c0_5 = arith.constant 0 : index
    %c0_6 = arith.constant 0 : index
    %5 = vector.load %arg3[%c0_3, %c0_4, %c0_5, %c0_6] : memref<1x3x32x32xf32, #tpu.memory_space<vmem>>, vector<1x1x32x32xf32>
    %6 = vector.shape_cast %5 : vector<1x1x32x32xf32> to vector<32x32xf32>
    %c0_7 = arith.constant 0 : index
    %c1 = arith.constant 1 : index
    %c0_8 = arith.constant 0 : index
    %c0_9 = arith.constant 0 : index
    %7 = vector.load %arg3[%c0_7, %c1, %c0_8, %c0_9] : memref<1x3x32x32xf32, #tpu.memory_space<vmem>>, vector<1x1x32x32xf32>
    %8 = vector.shape_cast %7 : vector<1x1x32x32xf32> to vector<32x32xf32>
    %c0_10 = arith.constant 0 : index
    %c2 = arith.constant 2 : index
    %c0_11 = arith.constant 0 : index
    %c0_12 = arith.constant 0 : index
    %9 = vector.load %arg3[%c0_10, %c2, %c0_11, %c0_12] : memref<1x3x32x32xf32, #tpu.memory_space<vmem>>, vector<1x1x32x32xf32>
    %10 = vector.shape_cast %9 : vector<1x1x32x32xf32> to vector<32x32xf32>
    %c0_13 = arith.constant 0 : index
    %c0_14 = arith.constant 0 : index
    %c0_15 = arith.constant 0 : index
    %11 = vector.load %arg4[%c0_13, %c0_14, %c0_15] : memref<1x32x32xf32, #tpu.memory_space<vmem>>, vector<1x32x32xf32>
    %12 = vector.shape_cast %11 : vector<1x32x32xf32> to vector<32x32xf32>
    %cst = arith.constant dense<0.000000e+00> : vector<8x32xf32>
    %13 = tpu.matmul %4, %6, %cst {dimension_numbers = #tpu.dot_dimension_numbers<[1], [0], [0], [1], [0, 0, 1, 1], [], []>} : vector<8x32xf32>, vector<32x32xf32>, vector<8x32xf32> -> vector<8x32xf32>
    %14 = vector.shape_cast %13 : vector<8x32xf32> to vector<1x8x32xf32>
    %c0_16 = arith.constant 0 : index
    %c0_17 = arith.constant 0 : index
    %c0_18 = arith.constant 0 : index
    %15 = vector.load %arg6[%c0_16, %c0_17, %c0_18] : memref<1x8x32xf32, #tpu.memory_space<vmem>>, vector<1x8x32xf32>
    tpu.vector_store %arg6[%c0_16, %c0_17, %c0_18], %14 {strides = array<i32>} : memref<1x8x32xf32, #tpu.memory_space<vmem>>, vector<1x8x32xf32>,
    %cst_19 = arith.constant dense<0.000000e+00> : vector<8x32xf32>
    %16 = tpu.matmul %4, %8, %cst_19 {dimension_numbers = #tpu.dot_dimension_numbers<[1], [0], [0], [1], [0, 0, 1, 1], [], []>} : vector<8x32xf32>, vector<32x32xf32>, vector<8x32xf32> -> vector<8x32xf32>
    %17 = vector.shape_cast %16 : vector<8x32xf32> to vector<1x8x32xf32>
    %c0_20 = arith.constant 0 : index
    %c0_21 = arith.constant 0 : index
    %c0_22 = arith.constant 0 : index
    %18 = vector.load %arg7[%c0_20, %c0_21, %c0_22] : memref<1x8x32xf32, #tpu.memory_space<vmem>>, vector<1x8x32xf32>
    tpu.vector_store %arg7[%c0_20, %c0_21, %c0_22], %17 {strides = array<i32>} : memref<1x8x32xf32, #tpu.memory_space<vmem>>, vector<1x8x32xf32>,
    %cst_23 = arith.constant dense<0.000000e+00> : vector<8x32xf32>
    %19 = tpu.matmul %4, %10, %cst_23 {dimension_numbers = #tpu.dot_dimension_numbers<[1], [0], [0], [1], [0, 0, 1, 1], [], []>} : vector<8x32xf32>, vector<32x32xf32>, vector<8x32xf32> -> vector<8x32xf32>
    %20 = vector.shape_cast %19 : vector<8x32xf32> to vector<1x8x32xf32>
    %c0_24 = arith.constant 0 : index
    %c0_25 = arith.constant 0 : index
    %c0_26 = arith.constant 0 : index
    %21 = vector.load %arg8[%c0_24, %c0_25, %c0_26] : memref<1x8x32xf32, #tpu.memory_space<vmem>>, vector<1x8x32xf32>
    tpu.vector_store %arg8[%c0_24, %c0_25, %c0_26], %20 {strides = array<i32>} : memref<1x8x32xf32, #tpu.memory_space<vmem>>, vector<1x8x32xf32>,
    %22 = tpu.iota {dimensions = array<i32: 0>} : vector<8x8xi32>
    %23 = tpu.iota {dimensions = array<i32: 1>} : vector<8x8xi32>
    %24 = arith.cmpi sle, %23, %22 : vector<8x8xi32>
    %25 = vector.shape_cast %24 : vector<8x8xi1> to vector<1x8x8xi1>
    %c0_27 = arith.constant 0 : index
    %c0_28 = arith.constant 0 : index
    %c0_29 = arith.constant 0 : index
    %26 = vector.load %arg6[%c0_27, %c0_28, %c0_29] : memref<1x8x32xf32, #tpu.memory_space<vmem>>, vector<1x8x32xf32>
    %cst_30 = arith.constant -1.000000e+30 : f32
    %27 = vector.broadcast %cst_30 : f32 to vector<1x8x1xf32>
    %cst_31 = arith.constant 0.000000e+00 : f32
    %28 = vector.broadcast %cst_31 : f32 to vector<1x8x1xf32>
    %cst_32 = arith.constant 0.000000e+00 : f32
    %29 = vector.broadcast %cst_32 : f32 to vector<1x8x32xf32>
    %c0_33 = arith.constant 0 : index
    %c0_34 = arith.constant 0 : index
    %c0_35 = arith.constant 0 : index
    %30 = vector.load %arg7[%c0_33, %c0_34, %c0_35] : memref<1x8x32xf32, #tpu.memory_space<vmem>>, vector<1x8x32xf32>
    %c0_36 = arith.constant 0 : index
    %c0_37 = arith.constant 0 : index
    %c0_38 = arith.constant 0 : index
    %31 = vector.load %arg8[%c0_36, %c0_37, %c0_38] : memref<1x8x32xf32, #tpu.memory_space<vmem>>, vector<1x8x32xf32>
    "tpu.trace_start"() <{level = 10 : i32, message = "bqd,bkd->bqk"}> : () -> ()
    %cst_39 = arith.constant dense<0.000000e+00> : vector<1x8x8xf32>
    %32 = tpu.matmul %26, %30, %cst_39 {dimension_numbers = #tpu.dot_dimension_numbers<[2], [2], [1], [1], [0, 0, 0, 1, 1, 1], [0], [0]>} : vector<1x8x32xf32>, vector<1x8x32xf32>, vector<1x8x8xf32> -> vector<1x8x8xf32>
    %cst_40 = arith.constant -1.000000e+30 : f32
    "tpu.trace_stop"() : () -> ()
    %33 = vector.broadcast %cst_40 : f32 to vector<1x8x8xf32>
    %34 = arith.select %25, %32, %33 : vector<1x8x8xi1>, vector<1x8x8xf32>
    %cst_41 = arith.constant dense<0xFF800000> : vector<1x8xf32>
    %35 = vector.multi_reduction <maximumf>, %34, %cst_41 [2] : vector<1x8x8xf32> to vector<1x8xf32>
    %36 = vector.shape_cast %35 : vector<1x8xf32> to vector<1x8x1xf32>
    %37 = arith.maximumf %27, %36 : vector<1x8x1xf32>
    %38 = arith.subf %27, %37 : vector<1x8x1xf32>
    %39 = math.exp %38 : vector<1x8x1xf32>
    %40 = vector.broadcast %37 : vector<1x8x1xf32> to vector<1x8x8xf32>
    %41 = arith.subf %34, %40 : vector<1x8x8xf32>
    %42 = math.exp %41 : vector<1x8x8xf32>
    %43 = arith.mulf %39, %28 : vector<1x8x1xf32>
    %cst_42 = arith.constant dense<0.000000e+00> : vector<1x8xf32>
    %44 = vector.multi_reduction <add>, %42, %cst_42 [2] : vector<1x8x8xf32> to vector<1x8xf32>
    %45 = vector.shape_cast %44 : vector<1x8xf32> to vector<1x8x1xf32>
    %46 = arith.addf %43, %45 : vector<1x8x1xf32>
    %47 = vector.broadcast %39 : vector<1x8x1xf32> to vector<1x8x32xf32>
    %48 = arith.mulf %47, %29 : vector<1x8x32xf32>
    "tpu.trace_start"() <{level = 10 : i32, message = "bqk,bkd->bqd"}> : () -> ()
    %cst_43 = arith.constant dense<0.000000e+00> : vector<1x8x32xf32>
    %49 = tpu.matmul %42, %31, %cst_43 {dimension_numbers = #tpu.dot_dimension_numbers<[2], [1], [1], [2], [0, 0, 0, 1, 1, 2], [0], [0]>} : vector<1x8x8xf32>, vector<1x8x32xf32>, vector<1x8x32xf32> -> vector<1x8x32xf32>
    "tpu.trace_stop"() : () -> ()
    %50 = arith.addf %48, %49 : vector<1x8x32xf32>
    %cst_44 = arith.constant 1.000000e+00 : f32
    %51 = vector.broadcast %cst_44 : f32 to vector<1x8x1xf32>
    %52 = arith.divf %51, %46 : vector<1x8x1xf32>
    %53 = vector.broadcast %52 : vector<1x8x1xf32> to vector<1x8x32xf32>
    %54 = arith.mulf %50, %53 : vector<1x8x32xf32>
    %c0_45 = arith.constant 0 : index
    %c0_46 = arith.constant 0 : index
    %c0_47 = arith.constant 0 : index
    %55 = vector.load %arg5[%c0_45, %c0_46, %c0_47] : memref<1x8x32xf32, #tpu.memory_space<vmem>>, vector<1x8x32xf32>
    %56 = vector.shape_cast %54 : vector<1x8x32xf32> to vector<8x32xf32>
    %cst_48 = arith.constant dense<0.000000e+00> : vector<8x32xf32>
    %57 = tpu.matmul %56, %12, %cst_48 {dimension_numbers = #tpu.dot_dimension_numbers<[1], [0], [0], [1], [0, 0, 1, 1], [], []>} : vector<8x32xf32>, vector<32x32xf32>, vector<8x32xf32> -> vector<8x32xf32>
    %58 = vector.shape_cast %57 : vector<8x32xf32> to vector<1x8x32xf32>
    %59 = arith.addf %58, %55 : vector<1x8x32xf32>
    %c0_49 = arith.constant 0 : index
    %c0_50 = arith.constant 0 : index
    %c0_51 = arith.constant 0 : index
    %60 = vector.load %arg5[%c0_49, %c0_50, %c0_51] : memref<1x8x32xf32, #tpu.memory_space<vmem>>, vector<1x8x32xf32>
    tpu.vector_store %arg5[%c0_49, %c0_50, %c0_51], %59 {strides = array<i32>} : memref<1x8x32xf32, #tpu.memory_space<vmem>>, vector<1x8x32xf32>,
    return
  }
  func.func @transform_0(%arg0: i32, %arg1: i32) -> (i32, i32, i32) {
    %c0_i32 = arith.constant 0 : i32
    %c0_i32_0 = arith.constant 0 : i32
    %c0_i32_1 = arith.constant 0 : i32
    return %arg0, %c0_i32, %c0_i32_0 : i32, i32, i32
  }
  func.func @transform_1(%arg0: i32, %arg1: i32) -> (i32, i32, i32, i32) {
    %c0_i32 = arith.constant 0 : i32
    %c0_i32_0 = arith.constant 0 : i32
    %c0_i32_1 = arith.constant 0 : i32
    %c0_i32_2 = arith.constant 0 : i32
    return %arg1, %c0_i32, %c0_i32_0, %c0_i32_1 : i32, i32, i32, i32
  }
  func.func @transform_2(%arg0: i32, %arg1: i32) -> (i32, i32, i32) {
    %c0_i32 = arith.constant 0 : i32
    %c0_i32_0 = arith.constant 0 : i32
    %c0_i32_1 = arith.constant 0 : i32
    return %arg1, %c0_i32, %c0_i32_0 : i32, i32, i32
  }
  func.func @transform_3(%arg0: i32, %arg1: i32) -> (i32, i32, i32) {
    %c0_i32 = arith.constant 0 : i32
    %c0_i32_0 = arith.constant 0 : i32
    %c0_i32_1 = arith.constant 0 : i32
    return %arg0, %c0_i32, %c0_i32_0 : i32, i32, i32
  }
}

</mosaic_0001>

<llo_original>
// kernel: tpu_custom_call.1
$region0: #{tpu_custom_call.1}
  #allocation0 [shape = 'u32[]', space=smem, size = 0x4, offset = 0x4, fixed_abs, tag = 'smem constant byte address 0x4 - core index']
  #allocation1 [shape = 'u32[72,128]{1,0:T(1,128)}', space=vmem, size = 0x9000, scoped, tag = 'internal scratch']
  #allocation2 [shape = 'f32[1,8,32]{2,1,0:T(8,128)}', space=vmem, size = 0x1000, scoped, tag = 'scratch operand']
  #allocation3 [shape = 'f32[1,8,32]{2,1,0:T(8,128)}', space=vmem, size = 0x1000, scoped, tag = 'scratch operand']
  #allocation4 [shape = 'f32[1,8,32]{2,1,0:T(8,128)}', space=vmem, size = 0x1000, scoped, tag = 'scratch operand']
  %s0 = inlined_call_operand.hbm [shape: f32[2,8,32], index: 0, kind: input, shape index: {}]
  %s1 = inlined_call_operand.hbm [shape: f32[2,3,32,32], index: 1, kind: input, shape index: {}]
  %s2 = inlined_call_operand.hbm [shape: f32[2,32,32], index: 2, kind: input, shape index: {}]
  %s3 = inlined_call_operand.hbm [shape: f32[2,8,32], index: 3, kind: output, shape index: {}]
  %s4 = sld [smem:[#allocation0]]
  $region61: #{tpu_custom_call.1} parent=0
    _
  %s6 = ssub.s32 1, %s4
  %s7 = scalar_select 0, %s6, %s4
  $region1: #{tpu_custom_call.1} parent=0
    #allocation5 [shape = 'u8[8192]{0}', space=vmem, size = 0x2000, scoped, tag = 'input window, operand 0']
    #allocation6 [shape = 's32[2]{0}', space=sflag, size = 0x8, scoped, tag = 'scoped memory for tpu_custom_call.1']
    #allocation7 [shape = 's32[2]{0}', space=sflag, size = 0x8, scoped, tag = 'scoped memory for tpu_custom_call.1']
    #allocation8 [shape = 'u8[98304]{0}', space=vmem, size = 0x18000, scoped, tag = 'input window, operand 1']
    #allocation9 [shape = 's32[2]{0}', space=sflag, size = 0x8, scoped, tag = 'scoped memory for tpu_custom_call.1']
    #allocation10 [shape = 'u8[32768]{0}', space=vmem, size = 0x8000, scoped, tag = 'input window, operand 2']
    #allocation11 [shape = 'u8[8192]{0}', space=vmem, size = 0x2000, scoped, tag = 'output window, operand 0']
    %8 = vsyncpa [#allocation6], 0
    %s9 = scalar_lea.sflag [#allocation6], 1
    %10 = vsyncpa %s9, 0
    %11 = vsyncpa [#allocation9], 0
    %s12 = scalar_lea.sflag [#allocation9], 1
    %13 = vsyncpa %s12, 0
    %14 = vsyncpa [#allocation7], 0
    %s15 = scalar_lea.sflag [#allocation7], 1
    %16 = vsyncpa %s15, 0
    loop: start=0, step=1, limit=6
    $region2: #{tpu_custom_call.1} parent=1 // loop_pre_header
      _
    $region3: #{tpu_custom_call.1} parent=1 // loop_header
      %s18 = sphi 0, %s22
      %p19 = scmp.ge.s32.totalorder %s18, 6
      %s25 = sphi 0, %s37
      %s26 = sphi 0, %s33
      %s27 = sphi 0, %s25
      %s28 = sphi 0, %s26
      %s29 = sphi 0, %s27
      %s30 = sphi 0, %s28
      %s40 = sphi 0, %s42
      %s43 = sphi 0, %s40
      %s44 = sphi 0, %s43
      %s60 = sphi 0, %s44
      %s66 = sphi 0, %s68
      %s69 = sphi 0, %s66
      %s70 = sphi 0, %s69
      %s86 = sphi 0, %s70
      %s92 = sphi 0, %s94
      %s95 = sphi 0, %s92
      %s96 = sphi 0, %s95
      %s112 = sphi 0, %s96
      %s118 = sphi 0, %s120
      %s121 = sphi 0, %s118
      %s122 = sphi 0, %s121
      %s138 = sphi 0, %s122
    $region4: #{tpu_custom_call.1} parent=1 // loop_header_branch
      %21 = sbr.rel (%p19) target = $region8
    $region5: #{tpu_custom_call.1} parent=1 // loop_body
      %s23 = ssub.s32 %s18, 1
      %s24 = ssub.s32 %s18, 2
      %s31 = sadd.s32 1, %s26
      %p32 = scmp.ge.s32.totalorder %s31, 2
      %s33 = scalar_select %p32, 0, %s31
      %s34 = sadd.s32 1, %s25
      %s35 = scalar_select %p32, %s34, %s25
      %p36 = scmp.ge.s32.totalorder %s35, 2
      %s37 = scalar_select %p36, 0, %s35
      %s38 = ssub.s32 %s25, %s37
      %p39 = scmp.eq.s32.totalorder %s38, 0
      %s41 = sadd.s32 %s40, 1
      %s42 = scalar_select %p39, %s40, %s41
      %p45 = pneg %p39
      %p46 = scmp.eq.s32.totalorder %s18, 3
      %p47 = por %p45, %p46
      %p48 = scmp.ne.s32.totalorder %s40, %s43
      %p49 = scmp.eq.s32.totalorder %s18, 0
      %p50 = por %p48, %p49
      %p51 = scmp.ne.s32.totalorder %s40, %s43
      %p52 = scmp.eq.s32.totalorder %s23, 3
      %p53 = por %p51, %p52
      %p54 = scmp.ne.s32.totalorder %s43, %s44
      %p55 = scmp.eq.s32.totalorder %s23, 0
      %p56 = por %p54, %p55
      %p57 = scmp.ne.s32.totalorder %s43, %s44
      %p58 = scmp.eq.s32.totalorder %s24, 3
      %p59 = por %p57, %p58
      %p61 = scmp.ne.s32.totalorder %s44, %s60
      %p62 = scmp.eq.s32.totalorder %s24, 0
      %p63 = por %p61, %p62
      %s64 = ssub.s32 %s26, %s33
      %p65 = scmp.eq.s32.totalorder %s64, 0
      %s67 = sadd.s32 %s66, 1
      %s68 = scalar_select %p65, %s66, %s67
      %p71 = pneg %p65
      %p72 = scmp.eq.s32.totalorder %s18, 3
      %p73 = por %p71, %p72
      %p74 = scmp.ne.s32.totalorder %s66, %s69
      %p75 = scmp.eq.s32.totalorder %s18, 0
      %p76 = por %p74, %p75
      %p77 = scmp.ne.s32.totalorder %s66, %s69
      %p78 = scmp.eq.s32.totalorder %s23, 3
      %p79 = por %p77, %p78
      %p80 = scmp.ne.s32.totalorder %s69, %s70
      %p81 = scmp.eq.s32.totalorder %s23, 0
      %p82 = por %p80, %p81
      %p83 = scmp.ne.s32.totalorder %s69, %s70
      %p84 = scmp.eq.s32.totalorder %s24, 3
      %p85 = por %p83, %p84
      %p87 = scmp.ne.s32.totalorder %s70, %s86
      %p88 = scmp.eq.s32.totalorder %s24, 0
      %p89 = por %p87, %p88
      %s90 = ssub.s32 %s26, %s33
      %p91 = scmp.eq.s32.totalorder %s90, 0
      %s93 = sadd.s32 %s92, 1
      %s94 = scalar_select %p91, %s92, %s93
      %p97 = pneg %p91
      %p98 = scmp.eq.s32.totalorder %s18, 3
      %p99 = por %p97, %p98
      %p100 = scmp.ne.s32.totalorder %s92, %s95
      %p101 = scmp.eq.s32.totalorder %s18, 0
      %p102 = por %p100, %p101
      %p103 = scmp.ne.s32.totalorder %s92, %s95
      %p104 = scmp.eq.s32.totalorder %s23, 3
      %p105 = por %p103, %p104
      %p106 = scmp.ne.s32.totalorder %s95, %s96
      %p107 = scmp.eq.s32.totalorder %s23, 0
      %p108 = por %p106, %p107
      %p109 = scmp.ne.s32.totalorder %s95, %s96
      %p110 = scmp.eq.s32.totalorder %s24, 3
      %p111 = por %p109, %p110
      %p113 = scmp.ne.s32.totalorder %s96, %s112
      %p114 = scmp.eq.s32.totalorder %s24, 0
      %p115 = por %p113, %p114
      %s116 = ssub.s32 %s25, %s37
      %p117 = scmp.eq.s32.totalorder %s116, 0
      %s119 = sadd.s32 %s118, 1
      %s120 = scalar_select %p117, %s118, %s119
      %p123 = pneg %p117
      %p124 = scmp.eq.s32.totalorder %s18, 3
      %p125 = por %p123, %p124
      %p126 = scmp.ne.s32.totalorder %s118, %s121
      %p127 = scmp.eq.s32.totalorder %s18, 0
      %p128 = por %p126, %p127
      %p129 = scmp.ne.s32.totalorder %s118, %s121
      %p130 = scmp.eq.s32.totalorder %s23, 3
      %p131 = por %p129, %p130
      %p132 = scmp.ne.s32.totalorder %s121, %s122
      %p133 = scmp.eq.s32.totalorder %s23, 0
      %p134 = por %p132, %p133
      %p135 = scmp.ne.s32.totalorder %s121, %s122
      %p136 = scmp.eq.s32.totalorder %s24, 3
      %p137 = por %p135, %p136
      %p139 = scmp.ne.s32.totalorder %s122, %s138
      %p140 = scmp.eq.s32.totalorder %s24, 0
      %p141 = por %p139, %p140
      %p142 = scmp.le.s32.totalorder 1, %s18
      %p143 = scmp.lt.s32.totalorder %s18, 5
      %p144 = pnand %p142, %p143
      %p145 = pneg %p144
      // Predicated region
      $region9: #{tpu_custom_call.1} parent=5 // pred_check
        _
      $region10: #{tpu_custom_call.1} parent=5 // pred_check_branch
        %147 = sbr.rel (%p144) target = $region12
      $region11: #{tpu_custom_call.1} parent=5 // pred_region
        %s148 = ssub.s32 %s18, 1
      $region12: #{tpu_custom_call.1} parent=5 // pred_fallthru
        _
      %p149 = scmp.lt.s32.totalorder %s18, 4
      // Predicated region
      $region13: #{tpu_custom_call.1} parent=5 // pred_check
        %p150 = pneg %p149
      $region14: #{tpu_custom_call.1} parent=5 // pred_check_branch
        %152 = sbr.rel (%p150) target = $region16
      $region15: #{tpu_custom_call.1} parent=5 // pred_region
        // Predicated region
        $region17: #{tpu_custom_call.1} parent=15 // pred_check
          %p153 = pneg %p50
        $region18: #{tpu_custom_call.1} parent=15 // pred_check_branch
          %155 = sbr.rel (%p153) target = $region20
        $region19: #{tpu_custom_call.1} parent=15 // pred_region
          %s156 = sand.u32 %s40, 1
          %s157 = scalar_lea.sflag [#allocation6], %s156
          %s158 = sand.u32 %s40, 1
          %s159 = smul.addr %s158, 8
          %s160 = scalar_lea.vmem [#allocation5], %s159
          %162 = vsyncadd %s157, 0
          %s163 = smul.addr %s25, 8
          %s164 = scalar_lea.hbm %s0, %s163
          %s166 = sshll.u32 %s164, 4
          %s167 = int_to_ptr.hbm [resolvable:$true] %s166
          %s168 = sshll.u32 %s160, 4
          %s169 = int_to_ptr.vmem [resolvable:$true] %s168
          %171 = dma.hbm_to_vmem [thread:$0]  %s167, 128, %s169, %s157
        $region20: #{tpu_custom_call.1} parent=15 // pred_fallthru
          _
        // Predicated region
        $region21: #{tpu_custom_call.1} parent=15 // pred_check
          %p172 = pneg %p76
        $region22: #{tpu_custom_call.1} parent=15 // pred_check_branch
          %174 = sbr.rel (%p172) target = $region24
        $region23: #{tpu_custom_call.1} parent=15 // pred_region
          %s175 = sand.u32 %s18, 1
          %s176 = scalar_lea.sflag [#allocation9], %s175
          %s177 = sand.u32 %s66, 1
          %s178 = smul.addr %s177, 96
          %s179 = scalar_lea.vmem [#allocation8], %s178
          %181 = vsyncadd %s176, 0
          %s182 = smul.addr %s26, 12
          %s183 = smul.addr %s182, 8
          %s184 = scalar_lea.hbm %s1, %s183
          %s185 = sshll.u32 %s184, 4
          %s186 = int_to_ptr.hbm [resolvable:$true] %s185
          %s187 = sshll.u32 %s179, 4
          %s188 = int_to_ptr.vmem [resolvable:$true] %s187
          %193 = dma.hbm_to_vmem [thread:$0]  %s186, 1536, %s188, %s176, 128, 128, 8
        $region24: #{tpu_custom_call.1} parent=15 // pred_fallthru
          _
        // Predicated region
        $region25: #{tpu_custom_call.1} parent=15 // pred_check
          %p194 = pneg %p102
        $region26: #{tpu_custom_call.1} parent=15 // pred_check_branch
          %196 = sbr.rel (%p194) target = $region28
        $region27: #{tpu_custom_call.1} parent=15 // pred_region
          %s197 = sand.u32 %s18, 1
          %s198 = scalar_lea.sflag [#allocation9], %s197
          %s199 = sand.u32 %s92, 1
          %s200 = smul.addr %s199, 32
          %s201 = scalar_lea.vmem [#allocation10], %s200
          %203 = vsyncadd %s198, 0
          %s204 = smul.addr %s26, 4
          %s205 = smul.addr %s204, 8
          %s206 = scalar_lea.hbm %s2, %s205
          %s207 = sshll.u32 %s206, 4
          %s208 = int_to_ptr.hbm [resolvable:$true] %s207
          %s209 = sshll.u32 %s201, 4
          %s210 = int_to_ptr.vmem [resolvable:$true] %s209
          %215 = dma.hbm_to_vmem [thread:$0]  %s208, 512, %s210, %s198, 128, 128, 8
        $region28: #{tpu_custom_call.1} parent=15 // pred_fallthru
          _
      $region16: #{tpu_custom_call.1} parent=5 // pred_fallthru
        _
      %p216 = scmp.le.s32.totalorder 1, %s18
      %p217 = scmp.lt.s32.totalorder %s18, 5
      %p218 = pnand %p216, %p217
      %p219 = pneg %p218
      // Predicated region
      $region29: #{tpu_custom_call.1} parent=5 // pred_check
        _
      $region30: #{tpu_custom_call.1} parent=5 // pred_check_branch
        %221 = sbr.rel (%p218) target = $region32
      $region31: #{tpu_custom_call.1} parent=5 // pred_region
        %s222 = ssub.s32 %s18, 1
        %s223 = sand.u32 %s43, 1
        %s224 = scalar_lea.sflag [#allocation6], %s223
        %s225 = sand.u32 %s43, 1
        %s226 = smul.addr %s225, 8
        %s227 = scalar_lea.vmem [#allocation5], %s226
        // Predicated region
        $region33: #{tpu_custom_call.1} parent=31 // pred_check
          %p228 = pneg %p56
        $region34: #{tpu_custom_call.1} parent=31 // pred_check_branch
          %230 = sbr.rel (%p228) target = $region36
        $region35: #{tpu_custom_call.1} parent=31 // pred_region
          %232 = dma.done %s224, 128
        $region36: #{tpu_custom_call.1} parent=31 // pred_fallthru
          _
        %s233 = sand.u32 %s23, 1
        %s234 = scalar_lea.sflag [#allocation9], %s233
        %s235 = sand.u32 %s69, 1
        %s236 = smul.addr %s235, 96
        %s237 = scalar_lea.vmem [#allocation8], %s236
        // Predicated region
        $region37: #{tpu_custom_call.1} parent=31 // pred_check
          %p238 = pneg %p82
        $region38: #{tpu_custom_call.1} parent=31 // pred_check_branch
          %240 = sbr.rel (%p238) target = $region40
        $region39: #{tpu_custom_call.1} parent=31 // pred_region
          %242 = dma.done %s234, 1536
        $region40: #{tpu_custom_call.1} parent=31 // pred_fallthru
          _
        %s243 = sand.u32 %s23, 1
        %s244 = scalar_lea.sflag [#allocation9], %s243
        %s245 = sand.u32 %s95, 1
        %s246 = smul.addr %s245, 32
        %s247 = scalar_lea.vmem [#allocation10], %s246
        // Predicated region
        $region41: #{tpu_custom_call.1} parent=31 // pred_check
          %p248 = pneg %p108
        $region42: #{tpu_custom_call.1} parent=31 // pred_check_branch
          %250 = sbr.rel (%p248) target = $region44
        $region43: #{tpu_custom_call.1} parent=31 // pred_region
          %252 = dma.done %s244, 512
        $region44: #{tpu_custom_call.1} parent=31 // pred_fallthru
          _
        %s253 = sand.u32 %s43, 1
        %s254 = scalar_lea.sflag [#allocation6], %s253
        %s255 = sand.u32 %s43, 1
        %s256 = smul.addr %s255, 8
        %s257 = scalar_lea.vmem [#allocation5], %s256
        %p258 = pneg %p56
        %p259 = pneg %p53
        %s260 = sand.u32 %s23, 1
        %s261 = scalar_lea.sflag [#allocation9], %s260
        %s262 = sand.u32 %s69, 1
        %s263 = smul.addr %s262, 96
        %s264 = scalar_lea.vmem [#allocation8], %s263
        %p265 = pneg %p82
        %p266 = pneg %p79
        %s267 = sand.u32 %s23, 1
        %s268 = scalar_lea.sflag [#allocation9], %s267
        %s269 = sand.u32 %s95, 1
        %s270 = smul.addr %s269, 32
        %s271 = scalar_lea.vmem [#allocation10], %s270
        %p272 = pneg %p108
        %p273 = pneg %p105
        %p274 = pneg %p134
        %p275 = pneg %p131
        %s276 = sand.u32 %s121, 1
        %s277 = scalar_lea.sflag [#allocation7], %s276
        %s278 = sand.u32 %s121, 1
        %s279 = smul.addr %s278, 8
        %s280 = scalar_lea.vmem [#allocation11], %s279
        %p281 = scmp.eq.s32.totalorder %s28, 0
        // Predicated region
        $region45: #{tpu_custom_call.1} parent=31 // pred_check
          %p282 = pneg %p281
        $region46: #{tpu_custom_call.1} parent=31 // pred_check_branch
          %284 = sbr.rel (%p282) target = $region48
        $region47: #{tpu_custom_call.1} parent=31 // pred_region
          %v285 = vld [vmem:[%s227] sm:$0xff]
          %vm286 = vcmask 261120
          %287 = vst.msk [vmem:[%s280] sm:$0xff] %vm286, %v285
        $region48: #{tpu_custom_call.1} parent=31 // pred_fallthru
          _
        %v288 = vld [vmem:[%s280] sm:$0xff]
        %v289 = vld [vmem:[%s237] sm:$0xff]
        %v290 = vld [vmem:[%s237 + $0x8] sm:$0xff]
        %v291 = vld [vmem:[%s237 + $0x10] sm:$0xff]
        %v292 = vld [vmem:[%s237 + $0x18] sm:$0xff]
        %s293 = scalar_lea.vmem %s237, 32 [#allocation8]
        %v294 = vld [vmem:[%s293] sm:$0xff]
        %v295 = vld [vmem:[%s293 + $0x8] sm:$0xff]
        %v296 = vld [vmem:[%s293 + $0x10] sm:$0xff]
        %v297 = vld [vmem:[%s293 + $0x18] sm:$0xff]
        %s298 = scalar_lea.vmem %s237, 64 [#allocation8]
        %v299 = vld [vmem:[%s298] sm:$0xff]
        %v300 = vld [vmem:[%s298 + $0x8] sm:$0xff]
        %v301 = vld [vmem:[%s298 + $0x10] sm:$0xff]
        %v302 = vld [vmem:[%s298 + $0x18] sm:$0xff]
        %v303 = vld [vmem:[%s247] sm:$0xff]
        %v304 = vld [vmem:[%s247 + $0x8] sm:$0xff]
        %v305 = vld [vmem:[%s247 + $0x10] sm:$0xff]
        %v306 = vld [vmem:[%s247 + $0x18] sm:$0xff]
        %vm307 = vcmask 261120
        %v309 = vsel %vm307, %v288, 0
        %311 = vmatpush.msra.mxu0 0.0
        %312 = vmatpush.msra.mxu0 0.0
        %313 = vmatpush.msra.mxu0 0.0
        %314 = vmatpush.msra.mxu0 0.0
        %315 = vmatpush.msra.mxu0 0.0
        %316 = vmatpush.msra.mxu0 0.0
        %317 = vmatpush.msra.mxu0 0.0
        %318 = vmatpush.msra.mxu0 0.0
        %319 = vmatpush.msra.mxu0 0.0
        %320 = vmatpush.msra.mxu0 0.0
        %321 = vmatpush.msra.mxu0 0.0
        %322 = vmatpush.msra.mxu0 0.0
        %323 = vmatpush.msra.mxu0 %v292
        %324 = vmatpush.msra.mxu0 %v291
        %325 = vmatpush.msra.mxu0 %v290
        %326 = vmatpush.msra.mxu0 %v289
        %327 = vmatmul.f32.gmra.mxu0 %v309
        %v328 = vpop.f32.mrf.mxu0
        %v329 = vadd.f32 0.0, %v328
        %330 = vdwg.mxu0
        %331 = vst.msk [vmem:[#allocation2] sm:$0xff] %vm307, %v329
        %332 = vmatpush.msra.mxu0 0.0
        %333 = vmatpush.msra.mxu0 0.0
        %334 = vmatpush.msra.mxu0 0.0
        %335 = vmatpush.msra.mxu0 0.0
        %336 = vmatpush.msra.mxu0 0.0
        %337 = vmatpush.msra.mxu0 0.0
        %338 = vmatpush.msra.mxu0 0.0
        %339 = vmatpush.msra.mxu0 0.0
        %340 = vmatpush.msra.mxu0 0.0
        %341 = vmatpush.msra.mxu0 0.0
        %342 = vmatpush.msra.mxu0 0.0
        %343 = vmatpush.msra.mxu0 0.0
        %344 = vmatpush.msra.mxu0 %v297
        %345 = vmatpush.msra.mxu0 %v296
        %346 = vmatpush.msra.mxu0 %v295
        %347 = vmatpush.msra.mxu0 %v294
        %348 = vmatmul.f32.gmra.mxu0 %v309
        %v349 = vpop.f32.mrf.mxu0
        %v350 = vadd.f32 0.0, %v349
        %351 = vdwg.mxu0
        %352 = vst.msk [vmem:[#allocation3] sm:$0xff] %vm307, %v350
        %353 = vmatpush.msra.mxu0 0.0
        %354 = vmatpush.msra.mxu0 0.0
        %355 = vmatpush.msra.mxu0 0.0
        %356 = vmatpush.msra.mxu0 0.0
        %357 = vmatpush.msra.mxu0 0.0
        %358 = vmatpush.msra.mxu0 0.0
        %359 = vmatpush.msra.mxu0 0.0
        %360 = vmatpush.msra.mxu0 0.0
        %361 = vmatpush.msra.mxu0 0.0
        %362 = vmatpush.msra.mxu0 0.0
        %363 = vmatpush.msra.mxu0 0.0
        %364 = vmatpush.msra.mxu0 0.0
        %365 = vmatpush.msra.mxu0 %v302
        %366 = vmatpush.msra.mxu0 %v301
        %367 = vmatpush.msra.mxu0 %v300
        %368 = vmatpush.msra.mxu0 %v299
        %369 = vmatmul.f32.gmra.mxu0 %v309
        %v370 = vpop.f32.mrf.mxu0
        %v371 = vadd.f32 0.0, %v370
        %372 = vdwg.mxu0
        %373 = vst.msk [vmem:[#allocation4] sm:$0xff] %vm307, %v371
        %v374 = vlaneseq
        %v375 = vshrl.u32 %v374, 7
        %v376 = vlaneseq
        %v377 = vand.u32 %v376, 127
        %vm378 = vcmp.le.s32.totalorder %v377, %v375
        %v379 = vld [vmem:[#allocation2] sm:$0xff]
        %v380 = vld [vmem:[#allocation3] sm:$0xff]
        %v381 = vld [vmem:[#allocation4] sm:$0xff]
        %v383 = vsel %vm307, %v379, 0
        %v386 = vsel %vm307, %v380, 0
        %388 = vmatpush.xpose.msra.mxu0 0.0
        %389 = vmatpush.xpose.msra.mxu0 0.0
        %390 = vmatpush.xpose.msra.mxu0 0.0
        %391 = vmatpush.xpose.msra.mxu0 0.0
        %392 = vmatpush.xpose.msra.mxu0 0.0
        %393 = vmatpush.xpose.msra.mxu0 0.0
        %394 = vmatpush.xpose.msra.mxu0 0.0
        %395 = vmatpush.xpose.msra.mxu0 0.0
        %396 = vmatpush.xpose.msra.mxu0 0.0
        %397 = vmatpush.xpose.msra.mxu0 0.0
        %398 = vmatpush.xpose.msra.mxu0 0.0
        %399 = vmatpush.xpose.msra.mxu0 0.0
        %400 = vmatpush.xpose.msra.mxu0 0.0
        %401 = vmatpush.xpose.msra.mxu0 0.0
        %402 = vmatpush.xpose.msra.mxu0 0.0
        %403 = vmatpush.xpose.msra.mxu0 %v386
        %404 = vmatmul.f32.gmra.mxu0 %v383
        %v405 = vpop.f32.mrf.mxu0
        %v406 = vadd.f32 0.0, %v405
        %407 = vdwg.mxu0
        %v408 = vsel %vm378, %v406, -1e+30
        %vm409 = vcmask 64512
        %v410 = vsel %vm409, %v408, -inf
        %411 = vmax.xlane.f32.xlu0 %v410
        %v412 = vpop.xlane.xlu0 %411
        %v413 = vmax.f32 %v412, -1e+30
        %v414 = vsub.f32 -1e+30, %v413
        %v415 = vmul.f32 %v414, 1.442695
        %v416 = vpow.pop %v415
        %v417 = vsub.f32 %v408, %v413
        %v418 = vmul.f32 %v417, 1.442695
        %v419 = vpow.pop %v418
        %v420 = vmul.f32 %v416, 0.0
        %v421 = vsel %vm409, %v419, 0.0
        %422 = vadd.xlane.f32.xlu0 %v421
        %v423 = vpop.xlane.xlu0 %422
        %v424 = vadd.f32 %v420, %v423
        %v426 = vsel %vm409, %v419, 0
        %428 = vmatpush.msra.mxu0 0.0
        %429 = vmatpush.msra.mxu0 0.0
        %430 = vmatpush.msra.mxu0 0.0
        %431 = vmatpush.msra.mxu0 0.0
        %432 = vmatpush.msra.mxu0 0.0
        %433 = vmatpush.msra.mxu0 0.0
        %434 = vmatpush.msra.mxu0 0.0
        %435 = vmatpush.msra.mxu0 0.0
        %436 = vmatpush.msra.mxu0 0.0
        %437 = vmatpush.msra.mxu0 0.0
        %438 = vmatpush.msra.mxu0 0.0
        %439 = vmatpush.msra.mxu0 0.0
        %440 = vmatpush.msra.mxu0 0.0
        %441 = vmatpush.msra.mxu0 0.0
        %442 = vmatpush.msra.mxu0 0.0
        %443 = vmatpush.msra.mxu0 %v381
        %444 = vmatmul.f32.gmra.mxu0 %v426
        %v445 = vpop.f32.mrf.mxu0
        %v446 = vadd.f32 0.0, %v445
        %447 = vdwg.mxu0
        %v448 = vadd.f32 %v420, %v446
        %v449 = vrcp.pop %v424
        %v450 = vmul.f32 %v424, %v449
        %v451 = vsub.f32 1.0, %v450
        %v452 = vmul.f32 %v449, %v451
        %v453 = vadd.f32 %v449, %v452
        %vm454 = vweird.f32 %v424
        %vm455 = vweird.f32 %v449
        %vm456 = vmor %vm454, %vm455
        %v457 = vsel %vm456, %v449, %v453
        %v458 = vand.u32 2147483647, %v424
        %vm459 = vcmp.eq.f32.partialorder %v458, 8.507059e+37
        %v460 = vand.u32 %v424, 2147483648
        %v461 = vor.u32 1.1754944e-38, %v460
        %v462 = vsel %vm459, %v461, %v457
        %v463 = vmul.f32 1.0, %v462
        %v464 = vmul.f32 %v448, %v463
        %v465 = vld [vmem:[%s280] sm:$0xff]
        %v467 = vsel %vm307, %v464, 0
        %469 = vmatpush.msra.mxu0 0.0
        %470 = vmatpush.msra.mxu0 0.0
        %471 = vmatpush.msra.mxu0 0.0
        %472 = vmatpush.msra.mxu0 0.0
        %473 = vmatpush.msra.mxu0 0.0
        %474 = vmatpush.msra.mxu0 0.0
        %475 = vmatpush.msra.mxu0 0.0
        %476 = vmatpush.msra.mxu0 0.0
        %477 = vmatpush.msra.mxu0 0.0
        %478 = vmatpush.msra.mxu0 0.0
        %479 = vmatpush.msra.mxu0 0.0
        %480 = vmatpush.msra.mxu0 0.0
        %481 = vmatpush.msra.mxu0 %v306
        %482 = vmatpush.msra.mxu0 %v305
        %483 = vmatpush.msra.mxu0 %v304
        %484 = vmatpush.msra.mxu0 %v303
        %485 = vmatmul.f32.gmra.mxu0 %v467
        %v486 = vpop.f32.mrf.mxu0
        %v487 = vadd.f32 0.0, %v486
        %488 = vdwg.mxu0
        %v489 = vadd.f32 %v487, %v465
        %490 = vst.msk [vmem:[%s280] sm:$0xff] %vm307, %v489
        %s491 = sand.u32 %s121, 1
        %s492 = scalar_lea.sflag [#allocation7], %s491
        %s493 = sand.u32 %s121, 1
        %s494 = smul.addr %s493, 8
        %s495 = scalar_lea.vmem [#allocation11], %s494
        // Predicated region
        $region49: #{tpu_custom_call.1} parent=31 // pred_check
          %p496 = pneg %p131
        $region50: #{tpu_custom_call.1} parent=31 // pred_check_branch
          %498 = sbr.rel (%p496) target = $region52
        $region51: #{tpu_custom_call.1} parent=31 // pred_region
          %500 = vsyncadd %s492, 0
          %s501 = smul.addr %s27, 8
          %s502 = scalar_lea.hbm %s3, %s501
          %s504 = sshll.u32 %s495, 4
          %s505 = int_to_ptr.vmem [resolvable:$true] %s504
          %s506 = sshll.u32 %s502, 4
          %s507 = int_to_ptr.hbm [resolvable:$true] %s506
          %509 = dma.vmem_to_hbm [thread:$0]  %s505, 128, %s507, %s492
        $region52: #{tpu_custom_call.1} parent=31 // pred_fallthru
          _
      $region32: #{tpu_custom_call.1} parent=5 // pred_fallthru
        _
      %p510 = scmp.le.s32.totalorder 2, %s18
      // Predicated region
      $region53: #{tpu_custom_call.1} parent=5 // pred_check
        %p511 = pneg %p510
      $region54: #{tpu_custom_call.1} parent=5 // pred_check_branch
        %513 = sbr.rel (%p511) target = $region56
      $region55: #{tpu_custom_call.1} parent=5 // pred_region
        %s514 = ssub.s32 %s18, 2
        // Predicated region
        $region57: #{tpu_custom_call.1} parent=55 // pred_check
          %p515 = pneg %p137
        $region58: #{tpu_custom_call.1} parent=55 // pred_check_branch
          %517 = sbr.rel (%p515) target = $region60
        $region59: #{tpu_custom_call.1} parent=55 // pred_region
          %s518 = sand.u32 %s122, 1
          %s519 = scalar_lea.sflag [#allocation7], %s518
          %s520 = sand.u32 %s122, 1
          %s521 = smul.addr %s520, 8
          %s522 = scalar_lea.vmem [#allocation11], %s521
          %524 = dma.done %s519, 128
        $region60: #{tpu_custom_call.1} parent=55 // pred_fallthru
          _
      $region56: #{tpu_custom_call.1} parent=5 // pred_fallthru
        _
    $region6: #{tpu_custom_call.1} parent=1 // loop_footer
      %s22 = sadd.s32 1, %s18
    $region7: #{tpu_custom_call.1} parent=1 // loop_footer_branch
      %17 = sbr.rel target = $region3
    $region8: #{tpu_custom_call.1} parent=1 // loop_exit
      _
    %525 = vsyncpa [#allocation6], 1
    %s526 = scalar_lea.sflag [#allocation6], 1
    %527 = vsyncpa %s526, 1
    %528 = vsyncpa [#allocation9], 1
    %s529 = scalar_lea.sflag [#allocation9], 1
    %530 = vsyncpa %s529, 1
    %531 = vsyncpa [#allocation7], 1
    %s532 = scalar_lea.sflag [#allocation7], 1
    %533 = vsyncpa %s532, 1

</llo_original>
